<compile_context>
chip_gen: v5e
topology: v5e:2x2
jax: 0.10.0
libtpu: 0.0.40
codegen_flags: <defaults>
</compile_context>

<pallas_src>
import functools

import jax
import jax.numpy as jnp
from jax import lax
from jax.experimental import pallas as pl
from jax.experimental.pallas import tpu as pltpu


def _arc_biaffine_kernel(*refs, has_bias):
    if has_bias:
        head_ref, dep_ref, u_ref, bias_ref, out_ref = refs
    else:
        head_ref, dep_ref, u_ref, out_ref = refs
        bias_ref = None

    tb, tq, hp = dep_ref.shape  # dep block: (TB, TQ, Hp)

    # --- 1) shared (dep @ U) over all TB*TQ query rows in ONE wide MXU matmul
    # tq is a multiple of 8 and hp a multiple of 128, so this reshape is a
    # pure re-view (no VMEM copy).
    dep2d = dep_ref[...].reshape(tb * tq, hp)
    tmp = jnp.dot(dep2d, u_ref[...],
                  preferred_element_type=jnp.float32)        # (TB*TQ, Hp) f32

    # --- 2) fold the (head @ bias) term into the left operand (exact):
    # ((dep@U) + bias_row) @ head^T == (dep@U)@head^T + (head@bias) bcast over q
    if has_bias:
        tmp = tmp + bias_ref[...].astype(jnp.float32)        # (1, Hp) VPU add

    # Cast back to the operand dtype so the second matmul runs at MXU operand
    # peak (no-op in the f32 path).
    tmp = tmp.reshape(tb, tq, hp).astype(head_ref.dtype)

    # --- 3) batched contraction over H; transposed RHS consumed natively -----
    scores = lax.dot_general(
        tmp, head_ref[...],
        dimension_numbers=(((2,), (2,)), ((0,), (0,))),
        preferred_element_type=jnp.float32)                  # (TB, TQ, Lp)

    out_ref[...] = scores.astype(out_ref.dtype)


def _vmem_capacity_bytes(default=64 * 1024 * 1024):
    try:
        info = pltpu.get_tpu_info()
        cap = getattr(info, "vmem_capacity_bytes", None)
        if cap:
            return int(cap)
    except Exception:
        pass
    return default


def arc_biaffine(head, dep, U, bias=None, *, compute_dtype=None,
                 allow_small_fallback=False):
    """head, dep: [B, L, H]; U: [H, H]; bias: [H] or None. Returns [B, L, L].

    compute_dtype: optional narrower operand dtype (e.g. jnp.bfloat16) for the
      MXU; accumulation stays f32 and the output keeps the input dtype.
    allow_small_fallback: for tiny problems, skip the kernel and let XLA's
      fused einsum win (grid-step + launch overhead dominates there).
    """
    B, L, H = head.shape
    out_dtype = head.dtype
    has_bias = bias is not None

    if allow_small_fallback and B * L * L <= 64 * 64 and H <= 256:
        out = (dep @ U) @ jnp.swapaxes(head, -1, -2)
        if has_bias:
            out = out + (head @ bias)[:, None, :]
        return out.astype(out_dtype)

    # ---- pad L and H up to multiples of 128 (zero padding is exact) --------
    Lp = -(-L // 128) * 128
    Hp = -(-H // 128) * 128
    if Lp != L or Hp != H:
        head = jnp.pad(head, ((0, 0), (0, Lp - L), (0, Hp - H)))
        dep = jnp.pad(dep, ((0, 0), (0, Lp - L), (0, Hp - H)))
        U = jnp.pad(U, ((0, Hp - H), (0, Hp - H)))
        if has_bias:
            bias = jnp.pad(bias, (0, Hp - H))

    cdt = jnp.dtype(compute_dtype) if compute_dtype is not None else jnp.dtype(head.dtype)
    if cdt != head.dtype:
        head = head.astype(cdt)
        dep = dep.astype(cdt)
        U = U.astype(cdt)
        if has_bias:
            bias = bias.astype(cdt)

    in_b = cdt.itemsize
    out_b = jnp.dtype(out_dtype).itemsize

    # ---- per-generation VMEM budget, enforced via vmem_limit_bytes ---------
    vmem_cap = _vmem_capacity_bytes()
    vmem_budget = int(0.55 * vmem_cap)                    # tiling budget
    vmem_limit = min(int(vmem_budget * 1.5), int(0.85 * vmem_cap))

    def block_bytes(tb, tq):
        blocks = 2 * (tb * Lp * Hp * in_b                 # head block (2-buffered)
                      + tb * tq * Hp * in_b               # dep block
                      + tb * tq * Lp * out_b)             # out block
        params = 2 * (Hp * Hp + Hp) * in_b                # U + bias (constant index)
        temps = 4 * (tb * tq * Hp + tb * tq * Lp)         # f32 tmp + scores
        return blocks + params + temps

    # Query tile: largest multiple-of-128 divisor of Lp that fits the budget.
    tq = 128
    cand = Lp
    while cand >= 128:
        if Lp % cand == 0 and block_bytes(1, cand) <= vmem_budget:
            tq = cand
            break
        cand -= 128
    # TODO(synk): also tile the key axis (head / output last dim) for huge L
    # where even tq=128 exceeds the budget; vmem_limit covers typical sizes.

    # Batch tile: only grow when the q axis is already a single small block,
    # and never collapse the grid to (1, 1) (keep >=2 parallel blocks for the
    # 2-TensorCore v7x).
    tb = 1
    if tq == Lp and tq < 256 and B > 1:
        for c in range(2, B + 1):
            if B % c:
                continue
            if block_bytes(c, tq) > vmem_budget:
                break
            if B // c < 2:
                break
            tb = c
            if c * tq >= 256:
                break

    grid = (B // tb, Lp // tq)

    in_specs = [
        pl.BlockSpec((tb, Lp, Hp), lambda b, q: (b, 0, 0)),   # head: full key axis, resident across q
        pl.BlockSpec((tb, tq, Hp), lambda b, q: (b, q, 0)),   # dep: query rows
        pl.BlockSpec((Hp, Hp), lambda b, q: (0, 0)),          # U (shared)
    ]
    args = [head, dep, U]
    if has_bias:
        in_specs.append(pl.BlockSpec((1, Hp), lambda b, q: (0, 0)))   # bias row
        args.append(bias.reshape(1, Hp))

    flops = B * (2 * Lp * Hp * Hp + 2 * Lp * Lp * Hp) + (B * Lp * Hp if has_bias else 0)
    bytes_accessed = (2 * B * Lp * Hp * in_b + B * Lp * Lp * out_b
                      + (Hp * Hp + (Hp if has_bias else 0)) * in_b)
    cost = pl.CostEstimate(flops=flops, transcendentals=0,
                           bytes_accessed=bytes_accessed)

    kernel = functools.partial(_arc_biaffine_kernel, has_bias=has_bias)

    out = pl.pallas_call(
        kernel,
        out_shape=jax.ShapeDtypeStruct((B, Lp, Lp), out_dtype),
        grid_spec=pltpu.PrefetchScalarGridSpec(
            num_scalar_prefetch=0,
            grid=grid,
            in_specs=in_specs,
            out_specs=pl.BlockSpec((tb, tq, Lp), lambda b, q: (b, q, 0)),
        ),
        compiler_params=pltpu.CompilerParams(
            dimension_semantics=("parallel", "parallel"),
            vmem_limit_bytes=vmem_limit),
        cost_estimate=cost,
    )(*args)

    if Lp != L:
        out = out[:, :L, :L]
    return out


if __name__ == "__main__":
    B, L, H = 2, 8, 32
    key = jax.random.PRNGKey(0)
    k_head, k_dep, k_U, k_b = jax.random.split(key, 4)

    head = jax.random.normal(k_head, (B, L, H), dtype=jnp.float32)
    dep = jax.random.normal(k_dep, (B, L, H), dtype=jnp.float32)
    # Deterministic synthetic parameters (module __init__ shapes: U[H,H], bias[H])
    U = jax.random.normal(k_U, (H, H), dtype=jnp.float32) * 0.1
    bias = jax.random.normal(k_b, (H,), dtype=jnp.float32) * 0.1

    ref = jnp.einsum("blh,hk,bmk->blm", dep, U, head) + (head @ bias)[:, None, :]
    ref_nb = jnp.einsum("blh,hk,bmk->blm", dep, U, head)

    # Exact f32 path (bias)
    out = jax.block_until_ready(arc_biaffine(head, dep, U, bias))
    assert out.shape == (B, L, L)
    assert jnp.allclose(out, ref, atol=1e-4, rtol=1e-4)

    # Exact f32 path (no bias — statically skips the bias add)
    out_nb = jax.block_until_ready(arc_biaffine(head, dep, U, None))
    assert jnp.allclose(out_nb, ref_nb, atol=1e-4, rtol=1e-4)

    # Optional bf16-operand path (f32 accumulation) — looser tolerance
    out_bf = jax.block_until_ready(
        arc_biaffine(head, dep, U, bias, compute_dtype=jnp.bfloat16))
    assert jnp.allclose(out_bf, ref, atol=5e-2, rtol=5e-2)

    print("KERNEL_OK")
</pallas_src>

<mosaic_0001>
module attributes {stable_mosaic.version = 11 : i64} {
  func.func @_arc_biaffine_kernel(%arg0: i32, %arg1: i32, %arg2: memref<1x128x128xf32, #tpu.memory_space<vmem>>, %arg3: memref<1x128x128xf32, #tpu.memory_space<vmem>>, %arg4: memref<128x128xf32, #tpu.memory_space<vmem>>, %arg5: memref<1x128xf32, #tpu.memory_space<vmem>>, %arg6: memref<1x128x128xf32, #tpu.memory_space<vmem>>) attributes {dimension_semantics = [#tpu.dimension_semantics<parallel>, #tpu.dimension_semantics<parallel>], iteration_bounds = array<i64: 2, 1>, scalar_prefetch = 0 : i64, scratch_operands = 0 : i64, tpu.core_type = #tpu.core_type<tc>, window_params = [{transform_indices = @transform_0, window_bounds = array<i64: 1, 128, 128>}, {transform_indices = @transform_1, window_bounds = array<i64: 1, 128, 128>}, {pipeline_mode = #tpu.pipeline_mode<synchronous>, transform_indices = @transform_2, window_bounds = array<i64: 128, 128>}, {pipeline_mode = #tpu.pipeline_mode<synchronous>, transform_indices = @transform_3, window_bounds = array<i64: 1, 128>}, {transform_indices = @transform_4, window_bounds = array<i64: 1, 128, 128>}]} {
    %c0 = arith.constant 0 : index
    %c0_0 = arith.constant 0 : index
    %c0_1 = arith.constant 0 : index
    %0 = vector.load %arg3[%c0, %c0_0, %c0_1] : memref<1x128x128xf32, #tpu.memory_space<vmem>>, vector<1x128x128xf32>
    %1 = vector.shape_cast %0 : vector<1x128x128xf32> to vector<128x128xf32>
    %c0_2 = arith.constant 0 : index
    %c0_3 = arith.constant 0 : index
    %2 = vector.load %arg4[%c0_2, %c0_3] : memref<128x128xf32, #tpu.memory_space<vmem>>, vector<128x128xf32>
    %cst = arith.constant dense<0.000000e+00> : vector<128x128xf32>
    %3 = tpu.matmul %1, %2, %cst {dimension_numbers = #tpu.dot_dimension_numbers<[1], [0], [0], [1], [0, 0, 1, 1], [], []>} : vector<128x128xf32>, vector<128x128xf32>, vector<128x128xf32> -> vector<128x128xf32>
    %c0_4 = arith.constant 0 : index
    %c0_5 = arith.constant 0 : index
    %4 = vector.load %arg5[%c0_4, %c0_5] : memref<1x128xf32, #tpu.memory_space<vmem>>, vector<1x128xf32>
    %5 = vector.broadcast %4 : vector<1x128xf32> to vector<128x128xf32>
    %6 = arith.addf %3, %5 : vector<128x128xf32>
    %7 = vector.shape_cast %6 : vector<128x128xf32> to vector<1x128x128xf32>
    %c0_6 = arith.constant 0 : index
    %c0_7 = arith.constant 0 : index
    %c0_8 = arith.constant 0 : index
    %8 = vector.load %arg2[%c0_6, %c0_7, %c0_8] : memref<1x128x128xf32, #tpu.memory_space<vmem>>, vector<1x128x128xf32>
    %cst_9 = arith.constant dense<0.000000e+00> : vector<1x128x128xf32>
    %9 = tpu.matmul %7, %8, %cst_9 {dimension_numbers = #tpu.dot_dimension_numbers<[2], [2], [1], [1], [0, 0, 0, 1, 1, 1], [0], [0]>} : vector<1x128x128xf32>, vector<1x128x128xf32>, vector<1x128x128xf32> -> vector<1x128x128xf32>
    %c0_10 = arith.constant 0 : index
    %c0_11 = arith.constant 0 : index
    %c0_12 = arith.constant 0 : index
    %10 = vector.load %arg6[%c0_10, %c0_11, %c0_12] : memref<1x128x128xf32, #tpu.memory_space<vmem>>, vector<1x128x128xf32>
    tpu.vector_store %arg6[%c0_10, %c0_11, %c0_12], %9 {strides = array<i32>} : memref<1x128x128xf32, #tpu.memory_space<vmem>>, vector<1x128x128xf32>,
    return
  }
  func.func @transform_0(%arg0: i32, %arg1: i32) -> (i32, i32, i32) {
    %c0_i32 = arith.constant 0 : i32
    %c0_i32_0 = arith.constant 0 : i32
    %c0_i32_1 = arith.constant 0 : i32
    return %arg0, %c0_i32, %c0_i32_0 : i32, i32, i32
  }
  func.func @transform_1(%arg0: i32, %arg1: i32) -> (i32, i32, i32) {
    %c0_i32 = arith.constant 0 : i32
    %c0_i32_0 = arith.constant 0 : i32
    return %arg0, %arg1, %c0_i32 : i32, i32, i32
  }
  func.func @transform_2(%arg0: i32, %arg1: i32) -> (i32, i32) {
    %c0_i32 = arith.constant 0 : i32
    %c0_i32_0 = arith.constant 0 : i32
    %c0_i32_1 = arith.constant 0 : i32
    return %c0_i32, %c0_i32_0 : i32, i32
  }
  func.func @transform_3(%arg0: i32, %arg1: i32) -> (i32, i32) {
    %c0_i32 = arith.constant 0 : i32
    %c0_i32_0 = arith.constant 0 : i32
    %c0_i32_1 = arith.constant 0 : i32
    return %c0_i32, %c0_i32_0 : i32, i32
  }
  func.func @transform_4(%arg0: i32, %arg1: i32) -> (i32, i32, i32) {
    %c0_i32 = arith.constant 0 : i32
    %c0_i32_0 = arith.constant 0 : i32
    return %arg0, %arg1, %c0_i32 : i32, i32, i32
  }
}

</mosaic_0001>

<llo_original>
// kernel: tpu_custom_call.1
$region0: #{tpu_custom_call.1}
  #allocation0 [shape = 'u32[]', space=smem, size = 0x4, offset = 0x4, fixed_abs, tag = 'smem constant byte address 0x4 - core index']
  #allocation1 [shape = 'u32[72,128]{1,0:T(1,128)}', space=vmem, size = 0x9000, scoped, tag = 'internal scratch']
  %s0 = inlined_call_operand.hbm [shape: f32[2,128,128], index: 0, kind: input, shape index: {}]
  %s1 = inlined_call_operand.hbm [shape: f32[2,128,128], index: 1, kind: input, shape index: {}]
  %s2 = inlined_call_operand.hbm [shape: f32[128,128], index: 2, kind: input, shape index: {}]
  %s3 = inlined_call_operand.vmem [shape: f32[1,128], index: 3, kind: input, shape index: {}]
  %s4 = inlined_call_operand.hbm [shape: f32[2,128,128], index: 4, kind: output, shape index: {}]
  %s5 = sld [smem:[#allocation0]]
  $region61: #{tpu_custom_call.1} parent=0
    _
  %s7 = ssub.s32 1, %s5
  %s8 = scalar_select 0, %s7, %s5
  $region1: #{tpu_custom_call.1} parent=0
    #allocation2 [shape = 'u8[131072]{0}', space=vmem, size = 0x20000, scoped, tag = 'input window, operand 0']
    #allocation3 [shape = 's32[2]{0}', space=sflag, size = 0x8, scoped, tag = 'scoped memory for tpu_custom_call.1']
    #allocation4 [shape = 's32[2]{0}', space=sflag, size = 0x8, scoped, tag = 'scoped memory for tpu_custom_call.1']
    #allocation5 [shape = 'u8[131072]{0}', space=vmem, size = 0x20000, scoped, tag = 'input window, operand 1']
    #allocation6 [shape = 's32[2]{0}', space=sflag, size = 0x8, scoped, tag = 'scoped memory for tpu_custom_call.1']
    #allocation7 [shape = 'u8[65536]{0}', space=vmem, size = 0x10000, scoped, tag = 'input window, operand 2, single buffered']
    #allocation8 [shape = 'u8[131072]{0}', space=vmem, size = 0x20000, scoped, tag = 'output window, operand 0']
    %9 = vsyncpa [#allocation3], 0
    %s10 = scalar_lea.sflag [#allocation3], 1
    %11 = vsyncpa %s10, 0
    %12 = vsyncpa [#allocation6], 0
    %s13 = scalar_lea.sflag [#allocation6], 1
    %14 = vsyncpa %s13, 0
    %15 = vsyncpa [#allocation4], 0
    %s16 = scalar_lea.sflag [#allocation4], 1
    %17 = vsyncpa %s16, 0
    loop: start=0, step=1, limit=4
    $region2: #{tpu_custom_call.1} parent=1 // loop_pre_header
      _
    $region3: #{tpu_custom_call.1} parent=1 // loop_header
      %s19 = sphi 0, %s23
      %p20 = scmp.ge.s32.totalorder %s19, 4
      %s26 = sphi 0, %s38
      %s27 = sphi 0, %s34
      %s28 = sphi 0, %s26
      %s29 = sphi 0, %s27
      %s30 = sphi 0, %s28
      %s31 = sphi 0, %s29
      %s41 = sphi 0, %s43
      %s44 = sphi 0, %s41
      %s45 = sphi 0, %s44
      %s61 = sphi 0, %s45
      %s69 = sphi 0, %s71
      %s72 = sphi 0, %s69
      %s73 = sphi 0, %s72
      %s89 = sphi 0, %s73
      %s93 = sphi 0, %s93
      %s95 = sphi 0, %s93
      %s96 = sphi 0, %s95
      %s110 = sphi 0, %s96
      %s114 = sphi 0, %s114
      %s116 = sphi 0, %s114
      %s117 = sphi 0, %s116
      %s131 = sphi 0, %s117
      %s139 = sphi 0, %s141
      %s142 = sphi 0, %s139
      %s143 = sphi 0, %s142
      %s159 = sphi 0, %s143
    $region4: #{tpu_custom_call.1} parent=1 // loop_header_branch
      %22 = sbr.rel (%p20) target = $region8
    $region5: #{tpu_custom_call.1} parent=1 // loop_body
      %s24 = ssub.s32 %s19, 1
      %s25 = ssub.s32 %s19, 2
      %s32 = sadd.s32 1, %s27
      %p33 = scmp.ge.s32.totalorder %s32, 1
      %s34 = scalar_select %p33, 0, %s32
      %s35 = sadd.s32 1, %s26
      %s36 = scalar_select %p33, %s35, %s26
      %p37 = scmp.ge.s32.totalorder %s36, 2
      %s38 = scalar_select %p37, 0, %s36
      %s39 = ssub.s32 %s26, %s38
      %p40 = scmp.eq.s32.totalorder %s39, 0
      %s42 = sadd.s32 %s41, 1
      %s43 = scalar_select %p40, %s41, %s42
      %p46 = pneg %p40
      %p47 = scmp.eq.s32.totalorder %s19, 1
      %p48 = por %p46, %p47
      %p49 = scmp.ne.s32.totalorder %s41, %s44
      %p50 = scmp.eq.s32.totalorder %s19, 0
      %p51 = por %p49, %p50
      %p52 = scmp.ne.s32.totalorder %s41, %s44
      %p53 = scmp.eq.s32.totalorder %s24, 1
      %p54 = por %p52, %p53
      %p55 = scmp.ne.s32.totalorder %s44, %s45
      %p56 = scmp.eq.s32.totalorder %s24, 0
      %p57 = por %p55, %p56
      %p58 = scmp.ne.s32.totalorder %s44, %s45
      %p59 = scmp.eq.s32.totalorder %s25, 1
      %p60 = por %p58, %p59
      %p62 = scmp.ne.s32.totalorder %s45, %s61
      %p63 = scmp.eq.s32.totalorder %s25, 0
      %p64 = por %p62, %p63
      %s65 = ssub.s32 %s26, %s38
      %s66 = ssub.s32 %s27, %s34
      %s67 = sor.u32 %s65, %s66
      %p68 = scmp.eq.s32.totalorder %s67, 0
      %s70 = sadd.s32 %s69, 1
      %s71 = scalar_select %p68, %s69, %s70
      %p74 = pneg %p68
      %p75 = scmp.eq.s32.totalorder %s19, 1
      %p76 = por %p74, %p75
      %p77 = scmp.ne.s32.totalorder %s69, %s72
      %p78 = scmp.eq.s32.totalorder %s19, 0
      %p79 = por %p77, %p78
      %p80 = scmp.ne.s32.totalorder %s69, %s72
      %p81 = scmp.eq.s32.totalorder %s24, 1
      %p82 = por %p80, %p81
      %p83 = scmp.ne.s32.totalorder %s72, %s73
      %p84 = scmp.eq.s32.totalorder %s24, 0
      %p85 = por %p83, %p84
      %p86 = scmp.ne.s32.totalorder %s72, %s73
      %p87 = scmp.eq.s32.totalorder %s25, 1
      %p88 = por %p86, %p87
      %p90 = scmp.ne.s32.totalorder %s73, %s89
      %p91 = scmp.eq.s32.totalorder %s25, 0
      %p92 = por %p90, %p91
      %s94 = sadd.s32 %s93, 1
      %p97 = scmp.eq.s32.totalorder %s19, 1
      %p98 = scmp.ne.s32.totalorder %s93, %s95
      %p99 = scmp.eq.s32.totalorder %s19, 0
      %p100 = por %p98, %p99
      %p101 = scmp.ne.s32.totalorder %s93, %s95
      %p102 = scmp.eq.s32.totalorder %s24, 1
      %p103 = por %p101, %p102
      %p104 = scmp.ne.s32.totalorder %s95, %s96
      %p105 = scmp.eq.s32.totalorder %s24, 0
      %p106 = por %p104, %p105
      %p107 = scmp.ne.s32.totalorder %s95, %s96
      %p108 = scmp.eq.s32.totalorder %s25, 1
      %p109 = por %p107, %p108
      %p111 = scmp.ne.s32.totalorder %s96, %s110
      %p112 = scmp.eq.s32.totalorder %s25, 0
      %p113 = por %p111, %p112
      %s115 = sadd.s32 %s114, 1
      %p118 = scmp.eq.s32.totalorder %s19, 1
      %p119 = scmp.ne.s32.totalorder %s114, %s116
      %p120 = scmp.eq.s32.totalorder %s19, 0
      %p121 = por %p119, %p120
      %p122 = scmp.ne.s32.totalorder %s114, %s116
      %p123 = scmp.eq.s32.totalorder %s24, 1
      %p124 = por %p122, %p123
      %p125 = scmp.ne.s32.totalorder %s116, %s117
      %p126 = scmp.eq.s32.totalorder %s24, 0
      %p127 = por %p125, %p126
      %p128 = scmp.ne.s32.totalorder %s116, %s117
      %p129 = scmp.eq.s32.totalorder %s25, 1
      %p130 = por %p128, %p129
      %p132 = scmp.ne.s32.totalorder %s117, %s131
      %p133 = scmp.eq.s32.totalorder %s25, 0
      %p134 = por %p132, %p133
      %s135 = ssub.s32 %s26, %s38
      %s136 = ssub.s32 %s27, %s34
      %s137 = sor.u32 %s135, %s136
      %p138 = scmp.eq.s32.totalorder %s137, 0
      %s140 = sadd.s32 %s139, 1
      %s141 = scalar_select %p138, %s139, %s140
      %p144 = pneg %p138
      %p145 = scmp.eq.s32.totalorder %s19, 1
      %p146 = por %p144, %p145
      %p147 = scmp.ne.s32.totalorder %s139, %s142
      %p148 = scmp.eq.s32.totalorder %s19, 0
      %p149 = por %p147, %p148
      %p150 = scmp.ne.s32.totalorder %s139, %s142
      %p151 = scmp.eq.s32.totalorder %s24, 1
      %p152 = por %p150, %p151
      %p153 = scmp.ne.s32.totalorder %s142, %s143
      %p154 = scmp.eq.s32.totalorder %s24, 0
      %p155 = por %p153, %p154
      %p156 = scmp.ne.s32.totalorder %s142, %s143
      %p157 = scmp.eq.s32.totalorder %s25, 1
      %p158 = por %p156, %p157
      %p160 = scmp.ne.s32.totalorder %s143, %s159
      %p161 = scmp.eq.s32.totalorder %s25, 0
      %p162 = por %p160, %p161
      %p163 = scmp.le.s32.totalorder 1, %s19
      %p164 = scmp.lt.s32.totalorder %s19, 3
      %p165 = pnand %p163, %p164
      %p166 = pneg %p165
      // Predicated region
      $region9: #{tpu_custom_call.1} parent=5 // pred_check
        _
      $region10: #{tpu_custom_call.1} parent=5 // pred_check_branch
        %168 = sbr.rel (%p165) target = $region12
      $region11: #{tpu_custom_call.1} parent=5 // pred_region
        %s169 = ssub.s32 %s19, 1
        // Predicated region
        $region13: #{tpu_custom_call.1} parent=11 // pred_check
          %p170 = pneg %p106
        $region14: #{tpu_custom_call.1} parent=11 // pred_check_branch
          %172 = sbr.rel (%p170) target = $region16
        $region15: #{tpu_custom_call.1} parent=11 // pred_region
          %174 = vsyncadd [#allocation6], 0
          %s175 = sshll.u32 %s2, 4
          %s176 = int_to_ptr.hbm [resolvable:$true] %s175
          %s177 = sshll.u32 [#allocation7], 4
          %s178 = int_to_ptr.vmem [resolvable:$true] %s177
          %183 = dma.hbm_to_vmem [thread:$0]  %s176, 2048, %s178, [#allocation6], 128, 128, 8
        $region16: #{tpu_custom_call.1} parent=11 // pred_fallthru
          _
        // Predicated region
        $region17: #{tpu_custom_call.1} parent=11 // pred_check
          %p184 = pneg %p127
        $region18: #{tpu_custom_call.1} parent=11 // pred_check_branch
          %186 = sbr.rel (%p184) target = $region20
        $region19: #{tpu_custom_call.1} parent=11 // pred_region
          _
        $region20: #{tpu_custom_call.1} parent=11 // pred_fallthru
          _
      $region12: #{tpu_custom_call.1} parent=5 // pred_fallthru
        _
      %p187 = scmp.lt.s32.totalorder %s19, 2
      // Predicated region
      $region21: #{tpu_custom_call.1} parent=5 // pred_check
        %p188 = pneg %p187
      $region22: #{tpu_custom_call.1} parent=5 // pred_check_branch
        %190 = sbr.rel (%p188) target = $region24
      $region23: #{tpu_custom_call.1} parent=5 // pred_region
        // Predicated region
        $region25: #{tpu_custom_call.1} parent=23 // pred_check
          %p191 = pneg %p51
        $region26: #{tpu_custom_call.1} parent=23 // pred_check_branch
          %193 = sbr.rel (%p191) target = $region28
        $region27: #{tpu_custom_call.1} parent=23 // pred_region
          %s194 = sand.u32 %s41, 1
          %s195 = scalar_lea.sflag [#allocation3], %s194
          %s196 = sand.u32 %s41, 1
          %s197 = smul.addr %s196, 128
          %s198 = scalar_lea.vmem [#allocation2], %s197
          %200 = vsyncadd %s195, 0
          %s201 = smul.addr %s26, 16
          %s202 = smul.addr %s201, 8
          %s203 = scalar_lea.hbm %s0, %s202
          %s204 = sshll.u32 %s203, 4
          %s205 = int_to_ptr.hbm [resolvable:$true] %s204
          %s206 = sshll.u32 %s198, 4
          %s207 = int_to_ptr.vmem [resolvable:$true] %s206
          %212 = dma.hbm_to_vmem [thread:$0]  %s205, 2048, %s207, %s195, 128, 128, 8
        $region28: #{tpu_custom_call.1} parent=23 // pred_fallthru
          _
        // Predicated region
        $region29: #{tpu_custom_call.1} parent=23 // pred_check
          %p213 = pneg %p79
        $region30: #{tpu_custom_call.1} parent=23 // pred_check_branch
          %215 = sbr.rel (%p213) target = $region32
        $region31: #{tpu_custom_call.1} parent=23 // pred_region
          %s216 = sand.u32 %s19, 1
          %s217 = scalar_lea.sflag [#allocation6], %s216
          %s218 = sand.u32 %s69, 1
          %s219 = smul.addr %s218, 128
          %s220 = scalar_lea.vmem [#allocation5], %s219
          %s221 = smul.u32 16, %s27
          %223 = vsyncadd %s217, 0
          %s224 = smul.addr %s26, 16
          %s225 = sadd.s32 %s221, %s224
          %s226 = smul.addr %s225, 8
          %s227 = scalar_lea.hbm %s1, %s226
          %s228 = sshll.u32 %s227, 4
          %s229 = int_to_ptr.hbm [resolvable:$true] %s228
          %s230 = sshll.u32 %s220, 4
          %s231 = int_to_ptr.vmem [resolvable:$true] %s230
          %236 = dma.hbm_to_vmem [thread:$0]  %s229, 2048, %s231, %s217, 128, 128, 8
        $region32: #{tpu_custom_call.1} parent=23 // pred_fallthru
          _
      $region24: #{tpu_custom_call.1} parent=5 // pred_fallthru
        _
      %p237 = scmp.le.s32.totalorder 1, %s19
      %p238 = scmp.lt.s32.totalorder %s19, 3
      %p239 = pnand %p237, %p238
      %p240 = pneg %p239
      // Predicated region
      $region33: #{tpu_custom_call.1} parent=5 // pred_check
        _
      $region34: #{tpu_custom_call.1} parent=5 // pred_check_branch
        %242 = sbr.rel (%p239) target = $region36
      $region35: #{tpu_custom_call.1} parent=5 // pred_region
        %s243 = ssub.s32 %s19, 1
        %s244 = sand.u32 %s44, 1
        %s245 = scalar_lea.sflag [#allocation3], %s244
        %s246 = sand.u32 %s44, 1
        %s247 = smul.addr %s246, 128
        %s248 = scalar_lea.vmem [#allocation2], %s247
        // Predicated region
        $region37: #{tpu_custom_call.1} parent=35 // pred_check
          %p249 = pneg %p57
        $region38: #{tpu_custom_call.1} parent=35 // pred_check_branch
          %251 = sbr.rel (%p249) target = $region40
        $region39: #{tpu_custom_call.1} parent=35 // pred_region
          %253 = dma.done %s245, 2048
        $region40: #{tpu_custom_call.1} parent=35 // pred_fallthru
          _
        %s254 = sand.u32 %s24, 1
        %s255 = scalar_lea.sflag [#allocation6], %s254
        %s256 = sand.u32 %s72, 1
        %s257 = smul.addr %s256, 128
        %s258 = scalar_lea.vmem [#allocation5], %s257
        // Predicated region
        $region41: #{tpu_custom_call.1} parent=35 // pred_check
          %p259 = pneg %p85
        $region42: #{tpu_custom_call.1} parent=35 // pred_check_branch
          %261 = sbr.rel (%p259) target = $region44
        $region43: #{tpu_custom_call.1} parent=35 // pred_region
          %263 = dma.done %s255, 2048
        $region44: #{tpu_custom_call.1} parent=35 // pred_fallthru
          _
        // Predicated region
        $region45: #{tpu_custom_call.1} parent=35 // pred_check
          %p264 = pneg %p106
        $region46: #{tpu_custom_call.1} parent=35 // pred_check_branch
          %266 = sbr.rel (%p264) target = $region48
        $region47: #{tpu_custom_call.1} parent=35 // pred_region
          %268 = dma.done [#allocation6], 2048
        $region48: #{tpu_custom_call.1} parent=35 // pred_fallthru
          _
        %s269 = sand.u32 %s44, 1
        %s270 = scalar_lea.sflag [#allocation3], %s269
        %s271 = sand.u32 %s44, 1
        %s272 = smul.addr %s271, 128
        %s273 = scalar_lea.vmem [#allocation2], %s272
        %p274 = pneg %p57
        %p275 = pneg %p54
        %s276 = sand.u32 %s24, 1
        %s277 = scalar_lea.sflag [#allocation6], %s276
        %s278 = sand.u32 %s72, 1
        %s279 = smul.addr %s278, 128
        %s280 = scalar_lea.vmem [#allocation5], %s279
        %p281 = pneg %p85
        %p282 = pneg %p82
        %p283 = pneg %p106
        %p284 = pneg %p103
        %p285 = pneg %p127
        %p286 = pneg %p124
        %p287 = pneg %p155
        %p288 = pneg %p152
        %s289 = sand.u32 %s142, 1
        %s290 = scalar_lea.sflag [#allocation4], %s289
        %s291 = sand.u32 %s142, 1
        %s292 = smul.addr %s291, 128
        %s293 = scalar_lea.vmem [#allocation8], %s292
        %s294 = smul.u32 16, %s29
        %s295 = smul.u32 16, %s29
        %v296 = vld [vmem:[%s258] sm:$0xff]
        %v297 = vld [vmem:[%s258 + $0x8] sm:$0xff]
        %v298 = vld [vmem:[%s258 + $0x10] sm:$0xff]
        %v299 = vld [vmem:[%s258 + $0x18] sm:$0xff]
        %v300 = vld [vmem:[%s258 + $0x20] sm:$0xff]
        %v301 = vld [vmem:[%s258 + $0x28] sm:$0xff]
        %v302 = vld [vmem:[%s258 + $0x30] sm:$0xff]
        %v303 = vld [vmem:[%s258 + $0x38] sm:$0xff]
        %v304 = vld [vmem:[%s258 + $0x40] sm:$0xff]
        %v305 = vld [vmem:[%s258 + $0x48] sm:$0xff]
        %v306 = vld [vmem:[%s258 + $0x50] sm:$0xff]
        %v307 = vld [vmem:[%s258 + $0x58] sm:$0xff]
        %v308 = vld [vmem:[%s258 + $0x60] sm:$0xff]
        %v309 = vld [vmem:[%s258 + $0x68] sm:$0xff]
        %v310 = vld [vmem:[%s258 + $0x70] sm:$0xff]
        %v311 = vld [vmem:[%s258 + $0x78] sm:$0xff]
        %v312 = vld [vmem:[#allocation7] sm:$0xff]
        %v313 = vld [vmem:[#allocation7 + $0x8] sm:$0xff]
        %v314 = vld [vmem:[#allocation7 + $0x10] sm:$0xff]
        %v315 = vld [vmem:[#allocation7 + $0x18] sm:$0xff]
        %v316 = vld [vmem:[#allocation7 + $0x20] sm:$0xff]
        %v317 = vld [vmem:[#allocation7 + $0x28] sm:$0xff]
        %v318 = vld [vmem:[#allocation7 + $0x30] sm:$0xff]
        %v319 = vld [vmem:[#allocation7 + $0x38] sm:$0xff]
        %v320 = vld [vmem:[#allocation7 + $0x40] sm:$0xff]
        %v321 = vld [vmem:[#allocation7 + $0x48] sm:$0xff]
        %v322 = vld [vmem:[#allocation7 + $0x50] sm:$0xff]
        %v323 = vld [vmem:[#allocation7 + $0x58] sm:$0xff]
        %v324 = vld [vmem:[#allocation7 + $0x60] sm:$0xff]
        %v325 = vld [vmem:[#allocation7 + $0x68] sm:$0xff]
        %v326 = vld [vmem:[#allocation7 + $0x70] sm:$0xff]
        %v327 = vld [vmem:[#allocation7 + $0x78] sm:$0xff]
        %v328 = vld [vmem:[%s3] sm:$0x1]
        %v330 = vperm.slane %v328, 0
        %332 = vmatpush.msra.mxu0 %v327
        %333 = vmatpush.msra.mxu0 %v326
        %334 = vmatpush.msra.mxu0 %v325
        %335 = vmatpush.msra.mxu0 %v324
        %336 = vmatpush.msra.mxu0 %v323
        %337 = vmatpush.msra.mxu0 %v322
        %338 = vmatpush.msra.mxu0 %v321
        %339 = vmatpush.msra.mxu0 %v320
        %340 = vmatpush.msra.mxu0 %v319
        %341 = vmatpush.msra.mxu0 %v318
        %342 = vmatpush.msra.mxu0 %v317
        %343 = vmatpush.msra.mxu0 %v316
        %344 = vmatpush.msra.mxu0 %v315
        %345 = vmatpush.msra.mxu0 %v314
        %346 = vmatpush.msra.mxu0 %v313
        %347 = vmatpush.msra.mxu0 %v312
        %348 = vmatmul.f32.gmra.mxu0 %v296
        %v349 = vpop.f32.mrf.mxu0
        %v350 = vadd.f32 %v330, %v349
        %351 = vmatmul.f32.gmra.mxu0 %v297
        %v352 = vpop.f32.mrf.mxu0
        %v353 = vadd.f32 %v330, %v352
        %354 = vmatmul.f32.gmra.mxu0 %v298
        %v355 = vpop.f32.mrf.mxu0
        %v356 = vadd.f32 %v330, %v355
        %357 = vmatmul.f32.gmra.mxu0 %v299
        %v358 = vpop.f32.mrf.mxu0
        %v359 = vadd.f32 %v330, %v358
        %360 = vmatmul.f32.gmra.mxu0 %v300
        %v361 = vpop.f32.mrf.mxu0
        %v362 = vadd.f32 %v330, %v361
        %363 = vmatmul.f32.gmra.mxu0 %v301
        %v364 = vpop.f32.mrf.mxu0
        %v365 = vadd.f32 %v330, %v364
        %366 = vmatmul.f32.gmra.mxu0 %v302
        %v367 = vpop.f32.mrf.mxu0
        %v368 = vadd.f32 %v330, %v367
        %369 = vmatmul.f32.gmra.mxu0 %v303
        %v370 = vpop.f32.mrf.mxu0
        %v371 = vadd.f32 %v330, %v370
        %372 = vmatmul.f32.gmra.mxu0 %v304
        %v373 = vpop.f32.mrf.mxu0
        %v374 = vadd.f32 %v330, %v373
        %375 = vmatmul.f32.gmra.mxu0 %v305
        %v376 = vpop.f32.mrf.mxu0
        %v377 = vadd.f32 %v330, %v376
        %378 = vmatmul.f32.gmra.mxu0 %v306
        %v379 = vpop.f32.mrf.mxu0
        %v380 = vadd.f32 %v330, %v379
        %381 = vmatmul.f32.gmra.mxu0 %v307
        %v382 = vpop.f32.mrf.mxu0
        %v383 = vadd.f32 %v330, %v382
        %384 = vmatmul.f32.gmra.mxu0 %v308
        %v385 = vpop.f32.mrf.mxu0
        %v386 = vadd.f32 %v330, %v385
        %387 = vmatmul.f32.gmra.mxu0 %v309
        %v388 = vpop.f32.mrf.mxu0
        %v389 = vadd.f32 %v330, %v388
        %390 = vmatmul.f32.gmra.mxu0 %v310
        %v391 = vpop.f32.mrf.mxu0
        %v392 = vadd.f32 %v330, %v391
        %393 = vmatmul.f32.gmra.mxu0 %v311
        %v394 = vpop.f32.mrf.mxu0
        %v395 = vadd.f32 %v330, %v394
        %396 = vdwg.mxu0
        %v397 = vld [vmem:[%s248] sm:$0xff]
        %v398 = vld [vmem:[%s248 + $0x8] sm:$0xff]
        %v399 = vld [vmem:[%s248 + $0x10] sm:$0xff]
        %v400 = vld [vmem:[%s248 + $0x18] sm:$0xff]
        %v401 = vld [vmem:[%s248 + $0x20] sm:$0xff]
        %v402 = vld [vmem:[%s248 + $0x28] sm:$0xff]
        %v403 = vld [vmem:[%s248 + $0x30] sm:$0xff]
        %v404 = vld [vmem:[%s248 + $0x38] sm:$0xff]
        %v405 = vld [vmem:[%s248 + $0x40] sm:$0xff]
        %v406 = vld [vmem:[%s248 + $0x48] sm:$0xff]
        %v407 = vld [vmem:[%s248 + $0x50] sm:$0xff]
        %v408 = vld [vmem:[%s248 + $0x58] sm:$0xff]
        %v409 = vld [vmem:[%s248 + $0x60] sm:$0xff]
        %v410 = vld [vmem:[%s248 + $0x68] sm:$0xff]
        %v411 = vld [vmem:[%s248 + $0x70] sm:$0xff]
        %v412 = vld [vmem:[%s248 + $0x78] sm:$0xff]
        %413 = vmatpush.xpose.msra.mxu0 %v412
        %414 = vmatpush.xpose.msra.mxu0 %v411
        %415 = vmatpush.xpose.msra.mxu0 %v410
        %416 = vmatpush.xpose.msra.mxu0 %v409
        %417 = vmatpush.xpose.msra.mxu0 %v408
        %418 = vmatpush.xpose.msra.mxu0 %v407
        %419 = vmatpush.xpose.msra.mxu0 %v406
        %420 = vmatpush.xpose.msra.mxu0 %v405
        %421 = vmatpush.xpose.msra.mxu0 %v404
        %422 = vmatpush.xpose.msra.mxu0 %v403
        %423 = vmatpush.xpose.msra.mxu0 %v402
        %424 = vmatpush.xpose.msra.mxu0 %v401
        %425 = vmatpush.xpose.msra.mxu0 %v400
        %426 = vmatpush.xpose.msra.mxu0 %v399
        %427 = vmatpush.xpose.msra.mxu0 %v398
        %428 = vmatpush.xpose.msra.mxu0 %v397
        %429 = vmatmul.f32.gmra.mxu0 %v350
        %v430 = vpop.f32.mrf.mxu0
        %v431 = vadd.f32 0.0, %v430
        %432 = vmatmul.f32.gmra.mxu0 %v353
        %v433 = vpop.f32.mrf.mxu0
        %v434 = vadd.f32 0.0, %v433
        %435 = vmatmul.f32.gmra.mxu0 %v356
        %v436 = vpop.f32.mrf.mxu0
        %v437 = vadd.f32 0.0, %v436
        %438 = vmatmul.f32.gmra.mxu0 %v359
        %v439 = vpop.f32.mrf.mxu0
        %v440 = vadd.f32 0.0, %v439
        %441 = vmatmul.f32.gmra.mxu0 %v362
        %v442 = vpop.f32.mrf.mxu0
        %v443 = vadd.f32 0.0, %v442
        %444 = vmatmul.f32.gmra.mxu0 %v365
        %v445 = vpop.f32.mrf.mxu0
        %v446 = vadd.f32 0.0, %v445
        %447 = vmatmul.f32.gmra.mxu0 %v368
        %v448 = vpop.f32.mrf.mxu0
        %v449 = vadd.f32 0.0, %v448
        %450 = vmatmul.f32.gmra.mxu0 %v371
        %v451 = vpop.f32.mrf.mxu0
        %v452 = vadd.f32 0.0, %v451
        %453 = vmatmul.f32.gmra.mxu0 %v374
        %v454 = vpop.f32.mrf.mxu0
        %v455 = vadd.f32 0.0, %v454
        %456 = vmatmul.f32.gmra.mxu0 %v377
        %v457 = vpop.f32.mrf.mxu0
        %v458 = vadd.f32 0.0, %v457
        %459 = vmatmul.f32.gmra.mxu0 %v380
        %v460 = vpop.f32.mrf.mxu0
        %v461 = vadd.f32 0.0, %v460
        %462 = vmatmul.f32.gmra.mxu0 %v383
        %v463 = vpop.f32.mrf.mxu0
        %v464 = vadd.f32 0.0, %v463
        %465 = vmatmul.f32.gmra.mxu0 %v386
        %v466 = vpop.f32.mrf.mxu0
        %v467 = vadd.f32 0.0, %v466
        %468 = vmatmul.f32.gmra.mxu0 %v389
        %v469 = vpop.f32.mrf.mxu0
        %v470 = vadd.f32 0.0, %v469
        %471 = vmatmul.f32.gmra.mxu0 %v392
        %v472 = vpop.f32.mrf.mxu0
        %v473 = vadd.f32 0.0, %v472
        %474 = vmatmul.f32.gmra.mxu0 %v395
        %v475 = vpop.f32.mrf.mxu0
        %v476 = vadd.f32 0.0, %v475
        %477 = vdwg.mxu0
        %478 = vst [vmem:[%s293] sm:$0xff] %v431
        %479 = vst [vmem:[%s293 + $0x8] sm:$0xff] %v434
        %480 = vst [vmem:[%s293 + $0x10] sm:$0xff] %v437
        %481 = vst [vmem:[%s293 + $0x18] sm:$0xff] %v440
        %482 = vst [vmem:[%s293 + $0x20] sm:$0xff] %v443
        %483 = vst [vmem:[%s293 + $0x28] sm:$0xff] %v446
        %484 = vst [vmem:[%s293 + $0x30] sm:$0xff] %v449
        %485 = vst [vmem:[%s293 + $0x38] sm:$0xff] %v452
        %486 = vst [vmem:[%s293 + $0x40] sm:$0xff] %v455
        %487 = vst [vmem:[%s293 + $0x48] sm:$0xff] %v458
        %488 = vst [vmem:[%s293 + $0x50] sm:$0xff] %v461
        %489 = vst [vmem:[%s293 + $0x58] sm:$0xff] %v464
        %490 = vst [vmem:[%s293 + $0x60] sm:$0xff] %v467
        %491 = vst [vmem:[%s293 + $0x68] sm:$0xff] %v470
        %492 = vst [vmem:[%s293 + $0x70] sm:$0xff] %v473
        %493 = vst [vmem:[%s293 + $0x78] sm:$0xff] %v476
        %s494 = sand.u32 %s142, 1
        %s495 = scalar_lea.sflag [#allocation4], %s494
        %s496 = sand.u32 %s142, 1
        %s497 = smul.addr %s496, 128
        %s498 = scalar_lea.vmem [#allocation8], %s497
        // Predicated region
        $region49: #{tpu_custom_call.1} parent=35 // pred_check
          %p499 = pneg %p152
        $region50: #{tpu_custom_call.1} parent=35 // pred_check_branch
          %501 = sbr.rel (%p499) target = $region52
        $region51: #{tpu_custom_call.1} parent=35 // pred_region
          %s502 = smul.u32 16, %s29
          %504 = vsyncadd %s495, 0
          %s505 = smul.addr %s28, 16
          %s506 = sadd.s32 %s502, %s505
          %s507 = smul.addr %s506, 8
          %s508 = scalar_lea.hbm %s4, %s507
          %s509 = sshll.u32 %s498, 4
          %s510 = int_to_ptr.vmem [resolvable:$true] %s509
          %s511 = sshll.u32 %s508, 4
          %s512 = int_to_ptr.hbm [resolvable:$true] %s511
          %517 = dma.vmem_to_hbm [thread:$0]  %s510, 2048, %s512, %s495, 128, 128, 8
        $region52: #{tpu_custom_call.1} parent=35 // pred_fallthru
          _
      $region36: #{tpu_custom_call.1} parent=5 // pred_fallthru
        _
      %p518 = scmp.le.s32.totalorder 2, %s19
      // Predicated region
      $region53: #{tpu_custom_call.1} parent=5 // pred_check
        %p519 = pneg %p518
      $region54: #{tpu_custom_call.1} parent=5 // pred_check_branch
        %521 = sbr.rel (%p519) target = $region56
      $region55: #{tpu_custom_call.1} parent=5 // pred_region
        %s522 = ssub.s32 %s19, 2
        // Predicated region
        $region57: #{tpu_custom_call.1} parent=55 // pred_check
          %p523 = pneg %p158
        $region58: #{tpu_custom_call.1} parent=55 // pred_check_branch
          %525 = sbr.rel (%p523) target = $region60
        $region59: #{tpu_custom_call.1} parent=55 // pred_region
          %s526 = sand.u32 %s143, 1
          %s527 = scalar_lea.sflag [#allocation4], %s526
          %s528 = sand.u32 %s143, 1
          %s529 = smul.addr %s528, 128
          %s530 = scalar_lea.vmem [#allocation8], %s529
          %532 = dma.done %s527, 2048
        $region60: #{tpu_custom_call.1} parent=55 // pred_fallthru
          _
      $region56: #{tpu_custom_call.1} parent=5 // pred_fallthru
        _
    $region6: #{tpu_custom_call.1} parent=1 // loop_footer
      %s23 = sadd.s32 1, %s19
    $region7: #{tpu_custom_call.1} parent=1 // loop_footer_branch
      %18 = sbr.rel target = $region3
    $region8: #{tpu_custom_call.1} parent=1 // loop_exit
      _
    %533 = vsyncpa [#allocation3], 1
    %s534 = scalar_lea.sflag [#allocation3], 1
    %535 = vsyncpa %s534, 1
    %536 = vsyncpa [#allocation6], 1
    %s537 = scalar_lea.sflag [#allocation6], 1
    %538 = vsyncpa %s537, 1
    %539 = vsyncpa [#allocation4], 1
    %s540 = scalar_lea.sflag [#allocation4], 1
    %541 = vsyncpa %s540, 1

</llo_original>
